<compile_context>
chip_gen: v5e
topology: v5e:2x2
jax: 0.10.0
libtpu: 0.0.40
codegen_flags: <defaults>
</compile_context>

<pallas_src>
import functools

import jax
import jax.numpy as jnp
import numpy as np
from jax import lax
from jax.experimental import pallas as pl
from jax.experimental.pallas import tpu as pltpu

EPS = 1e-5          # torch.nn.InstanceNorm2d default eps
_LANE = 128
_SUBLANE = 8
_MAX_TILE_HW = 512  # spatial rows per grid step (bounds VMEM, enough steps to pipeline)


def _round_up(x, m):
    return (x + m - 1) // m * m


def _contract_bn_kernel(p_ref, w_ref, o_ref, sum_ref, sq_ref, *,
                        tile_hw, true_hw, neg_slope):
    """One (image, spatial-tile) grid step: conv-matmul + InstanceNorm + activation.

    p_ref   : (tile_hw, K_pad)     bf16 im2col patches for this spatial tile
    w_ref   : (K_pad, Cout_pad)    bf16 flattened conv weight (zero padded)
    o_ref   : (HW_pad, Cout_pad)   f32 per-image output, resident across the tile axis
    sum_ref : (1, Cout_pad)        f32 running per-channel sum
    sq_ref  : (1, Cout_pad)        f32 running per-channel sum of squares
    """
    t = pl.program_id(1)

    @pl.when(t == 0)
    def _():
        sum_ref[...] = jnp.zeros_like(sum_ref)
        sq_ref[...] = jnp.zeros_like(sq_ref)

    # Conv as matmul on the MXU (bf16 x bf16 -> f32 accumulate). Bias is dropped:
    # InstanceNorm(affine=False) subtracts the per-channel mean, cancelling it exactly.
    y = jnp.dot(p_ref[...], w_ref[...], preferred_element_type=jnp.float32)

    # Stash raw conv output into the resident per-image output block.
    row0 = pl.multiple_of(t * tile_hw, tile_hw)
    o_ref[pl.ds(row0, tile_hw), :] = y

    # One-pass stats. Padded spatial rows are exact zeros -> contribute nothing.
    sum_ref[...] += jnp.sum(y, axis=0, keepdims=True)
    sq_ref[...] += jnp.sum(y * y, axis=0, keepdims=True)

    @pl.when(t == pl.num_programs(1) - 1)
    def _():
        inv_hw = 1.0 / float(true_hw)                 # divide by TRUE spatial count
        mean = sum_ref[...] * inv_hw                  # (1, Cout_pad)
        var = jnp.maximum(sq_ref[...] * inv_hw - mean * mean, 0.0)
        scale = lax.rsqrt(var + EPS)                  # EUP, effectively free
        y_full = (o_ref[...] - mean) * scale
        if neg_slope == 0.0:
            o_ref[...] = jnp.maximum(y_full, 0.0)
        else:
            o_ref[...] = jnp.where(y_full > 0, y_full, neg_slope * y_full)


def _contract_nobn_kernel(p_ref, w_ref, b_ref, o_ref, *, neg_slope):
    """use_bn=False path: conv + bias + activation, no norm (output tiled per step)."""
    y = jnp.dot(p_ref[...], w_ref[...], preferred_element_type=jnp.float32) + b_ref[...]
    if neg_slope == 0.0:
        o_ref[...] = jnp.maximum(y, 0.0)
    else:
        o_ref[...] = jnp.where(y > 0, y, neg_slope * y)


def _im2col_stride2(x_pad, k=3, stride=2):
    """x_pad: (N, Hp, Wp, C) reflect-padded NHWC -> (N, Ho*Wo, k*k*C)."""
    N, Hp, Wp, C = x_pad.shape
    Ho = (Hp - k) // stride + 1
    Wo = (Wp - k) // stride + 1
    taps = []
    for kh in range(k):
        for kw in range(k):
            taps.append(
                x_pad[:, kh:kh + stride * Ho:stride, kw:kw + stride * Wo:stride, :]
            )  # (N, Ho, Wo, C)
    p = jnp.stack(taps, axis=3)                      # (N, Ho, Wo, k*k, C)
    return p.reshape(N, Ho * Wo, k * k * C), Ho, Wo


@functools.partial(jax.jit, static_argnames=("use_bn", "activation"))
def contracting_block(x_nchw, w_hwio, bias, use_bn=True, activation="relu"):
    """Forward pass matching PyTorch ContractingBlock.

    x_nchw : (N, Cin, H, W)
    w_hwio : (3, 3, Cin, 2*Cin)   conv weight (HWIO layout)
    bias   : (2*Cin,)
    returns: (N, 2*Cin, H//2, W//2)
    """
    N, Cin, H, W = x_nchw.shape
    Cout = w_hwio.shape[-1]
    neg_slope = 0.0 if activation == "relu" else 0.2

    # NCHW -> NHWC, reflect pad H/W by 1 (padding_mode='reflect').
    x = jnp.transpose(x_nchw, (0, 2, 3, 1))
    x_pad = jnp.pad(x, ((0, 0), (1, 1), (1, 1), (0, 0)), mode="reflect")

    # TODO(synk): im2col patches are still materialized in HBM (now bf16); a fully fused
    # version would DMA NHWC row tiles with halo and build the 9 taps in-kernel.
    patches, Ho, Wo = _im2col_stride2(x_pad)          # (N, HW, K)
    HW = Ho * Wo
    K = patches.shape[-1]

    # Lane-dense padding: K and Cout to multiples of 128, HW to the spatial tile size.
    K_pad = _round_up(K, _LANE)
    Cout_pad = _round_up(Cout, _LANE)
    tile_hw = min(_MAX_TILE_HW, _round_up(HW, _SUBLANE))
    HW_pad = _round_up(HW, tile_hw)
    n_tiles = HW_pad // tile_hw

    patches = jnp.pad(patches.astype(jnp.bfloat16),
                      ((0, 0), (0, HW_pad - HW), (0, K_pad - K)))
    w_flat = jnp.pad(w_hwio.reshape(K, Cout).astype(jnp.bfloat16),
                     ((0, K_pad - K), (0, Cout_pad - Cout)))

    grid = (N, n_tiles)
    p_spec = pl.BlockSpec((pl.Squeezed(), tile_hw, K_pad), lambda n, t: (n, t, 0))
    w_spec = pl.BlockSpec((K_pad, Cout_pad), lambda n, t: (0, 0))

    if use_bn:
        kernel = functools.partial(_contract_bn_kernel, tile_hw=tile_hw,
                                   true_hw=HW, neg_slope=neg_slope)
        out = pl.pallas_call(
            kernel,
            out_shape=jax.ShapeDtypeStruct((N, HW_pad, Cout_pad), jnp.float32),
            grid_spec=pltpu.PrefetchScalarGridSpec(
                num_scalar_prefetch=0,
                grid=grid,
                in_specs=[p_spec, w_spec],
                # Per-image output block stays resident across the spatial-tile axis.
                out_specs=pl.BlockSpec((pl.Squeezed(), HW_pad, Cout_pad),
                                       lambda n, t: (n, 0, 0)),
                scratch_shapes=[pltpu.VMEM((1, Cout_pad), jnp.float32),
                                pltpu.VMEM((1, Cout_pad), jnp.float32)],
            ),
            compiler_params=pltpu.CompilerParams(
                dimension_semantics=("parallel", "arbitrary"),
                vmem_limit_bytes=32 * 1024 * 1024,
            ),
        )(patches, w_flat)
    else:
        b2d = jnp.pad(bias.reshape(1, Cout).astype(jnp.float32),
                      ((0, 0), (0, Cout_pad - Cout)))
        kernel = functools.partial(_contract_nobn_kernel, neg_slope=neg_slope)
        out = pl.pallas_call(
            kernel,
            out_shape=jax.ShapeDtypeStruct((N, HW_pad, Cout_pad), jnp.float32),
            grid_spec=pltpu.PrefetchScalarGridSpec(
                num_scalar_prefetch=0,
                grid=grid,
                in_specs=[p_spec, w_spec,
                          pl.BlockSpec((1, Cout_pad), lambda n, t: (0, 0))],
                out_specs=pl.BlockSpec((pl.Squeezed(), tile_hw, Cout_pad),
                                       lambda n, t: (n, t, 0)),
            ),
            compiler_params=pltpu.CompilerParams(
                dimension_semantics=("parallel", "parallel"),
                vmem_limit_bytes=32 * 1024 * 1024,
            ),
        )(patches, w_flat, b2d)

    # Strip lane/spatial padding, (N, HW, Cout) -> NHWC -> NCHW.
    out = out[:, :HW, :Cout].reshape(N, Ho, Wo, Cout)
    return jnp.transpose(out, (0, 3, 1, 2))


def _reference(x_nchw, w_hwio, bias, use_bn=True, activation="relu"):
    """Pure-JAX f32 reference matching PyTorch semantics."""
    x = jnp.transpose(x_nchw, (0, 2, 3, 1))
    x_pad = jnp.pad(x, ((0, 0), (1, 1), (1, 1), (0, 0)), mode="reflect")
    y = lax.conv_general_dilated(
        x_pad.astype(jnp.float32), w_hwio.astype(jnp.float32),
        window_strides=(2, 2), padding="VALID",
        dimension_numbers=("NHWC", "HWIO", "NHWC"),
    ) + bias.astype(jnp.float32)
    if use_bn:
        mean = jnp.mean(y, axis=(1, 2), keepdims=True)
        var = jnp.mean((y - mean) ** 2, axis=(1, 2), keepdims=True)
        y = (y - mean) * lax.rsqrt(var + EPS)
    if activation == "relu":
        y = jnp.maximum(y, 0.0)
    else:
        y = jnp.where(y > 0, y, 0.2 * y)
    return jnp.transpose(y, (0, 3, 1, 2))


if __name__ == "__main__":
    key = jax.random.PRNGKey(0)
    k_x, k_w, k_b = jax.random.split(key, 3)

    N, Cin, H, W = 2, 4, 16, 16
    Cout = 2 * Cin

    x = jax.random.normal(k_x, (N, Cin, H, W), dtype=jnp.float32)
    # Deterministic synthetic init (kaiming-uniform-like bound).
    fan_in = Cin * 3 * 3
    bound = 1.0 / np.sqrt(fan_in)
    w = jax.random.uniform(k_w, (3, 3, Cin, Cout), minval=-bound, maxval=bound,
                           dtype=jnp.float32)
    b = jax.random.uniform(k_b, (Cout,), minval=-bound, maxval=bound,
                           dtype=jnp.float32)

    # use_bn=True (default PyTorch path): conv -> instance norm -> ReLU.
    out = jax.block_until_ready(contracting_block(x, w, b))
    assert out.shape == (N, Cout, H // 2, W // 2), out.shape
    ref = jax.block_until_ready(_reference(x, w, b, use_bn=True))
    np.testing.assert_allclose(np.asarray(out), np.asarray(ref), atol=3e-2, rtol=3e-2)

    # use_bn=False path: conv + bias -> ReLU.
    out_nb = jax.block_until_ready(contracting_block(x, w, b, use_bn=False))
    ref_nb = jax.block_until_ready(_reference(x, w, b, use_bn=False))
    np.testing.assert_allclose(np.asarray(out_nb), np.asarray(ref_nb), atol=3e-2, rtol=3e-2)

    print("KERNEL_OK")
</pallas_src>

<mosaic_0001>
module attributes {stable_mosaic.version = 11 : i64} {
  func.func @_contract_bn_kernel(%arg0: i32, %arg1: i32, %arg2: memref<1x64x128xbf16, #tpu.memory_space<vmem>>, %arg3: memref<128x128xbf16, #tpu.memory_space<vmem>>, %arg4: memref<1x64x128xf32, #tpu.memory_space<vmem>>, %arg5: memref<1x128xf32, #tpu.memory_space<vmem>>, %arg6: memref<1x128xf32, #tpu.memory_space<vmem>>) attributes {dimension_semantics = [#tpu.dimension_semantics<parallel>, #tpu.dimension_semantics<arbitrary>], iteration_bounds = array<i64: 2, 1>, scalar_prefetch = 0 : i64, scratch_operands = 2 : i64, tpu.core_type = #tpu.core_type<tc>, window_params = [{transform_indices = @transform_0, window_bounds = array<i64: 1, 64, 128>}, {pipeline_mode = #tpu.pipeline_mode<synchronous>, transform_indices = @transform_1, window_bounds = array<i64: 128, 128>}, {transform_indices = @transform_2, window_bounds = array<i64: 1, 64, 128>}]} {
    %c0_i32 = arith.constant 0 : i32
    %0 = arith.cmpi eq, %arg1, %c0_i32 : i32
    %1 = arith.extui %0 : i1 to i32
    %c0_i32_0 = arith.constant 0 : i32
    %2 = arith.cmpi ne, %1, %c0_i32_0 : i32
    scf.if %2 {
      %cst_19 = arith.constant 0.000000e+00 : f32
      %27 = vector.broadcast %cst_19 : f32 to vector<1x128xf32>
      %c0_20 = arith.constant 0 : index
      %c0_21 = arith.constant 0 : index
      %28 = vector.load %arg5[%c0_20, %c0_21] : memref<1x128xf32, #tpu.memory_space<vmem>>, vector<1x128xf32>
      tpu.vector_store %arg5[%c0_20, %c0_21], %27 {strides = array<i32>} : memref<1x128xf32, #tpu.memory_space<vmem>>, vector<1x128xf32>,
      %cst_22 = arith.constant 0.000000e+00 : f32
      %29 = vector.broadcast %cst_22 : f32 to vector<1x128xf32>
      %c0_23 = arith.constant 0 : index
      %c0_24 = arith.constant 0 : index
      %30 = vector.load %arg6[%c0_23, %c0_24] : memref<1x128xf32, #tpu.memory_space<vmem>>, vector<1x128xf32>
      tpu.vector_store %arg6[%c0_23, %c0_24], %29 {strides = array<i32>} : memref<1x128xf32, #tpu.memory_space<vmem>>, vector<1x128xf32>,
    } else {
    }
    %c0 = arith.constant 0 : index
    %c0_1 = arith.constant 0 : index
    %c0_2 = arith.constant 0 : index
    %3 = vector.load %arg2[%c0, %c0_1, %c0_2] : memref<1x64x128xbf16, #tpu.memory_space<vmem>>, vector<1x64x128xbf16>
    %4 = vector.shape_cast %3 : vector<1x64x128xbf16> to vector<64x128xbf16>
    %c0_3 = arith.constant 0 : index
    %c0_4 = arith.constant 0 : index
    %5 = vector.load %arg3[%c0_3, %c0_4] : memref<128x128xbf16, #tpu.memory_space<vmem>>, vector<128x128xbf16>
    %cst = arith.constant dense<0.000000e+00> : vector<64x128xf32>
    %6 = tpu.matmul %4, %5, %cst {dimension_numbers = #tpu.dot_dimension_numbers<[1], [0], [0], [1], [0, 0, 1, 1], [], []>} : vector<64x128xbf16>, vector<128x128xbf16>, vector<64x128xf32> -> vector<64x128xf32>
    %c64_i32 = arith.constant 64 : i32
    %7 = arith.muli %arg1, %c64_i32 : i32
    %8 = tpu.assume_multiple %7, 64 : i32
    %c0_5 = arith.constant 0 : index
    %9 = arith.index_cast %8 : i32 to index
    %c0_6 = arith.constant 0 : index
    %10 = vector.load %arg4[%c0_5, %9, %c0_6] : memref<1x64x128xf32, #tpu.memory_space<vmem>>, vector<1x64x128xf32>
    %11 = vector.shape_cast %10 : vector<1x64x128xf32> to vector<64x128xf32>
    %12 = vector.shape_cast %6 : vector<64x128xf32> to vector<1x64x128xf32>
    tpu.vector_store %arg4[%c0_5, %9, %c0_6], %12 {strides = array<i32>} : memref<1x64x128xf32, #tpu.memory_space<vmem>>, vector<1x64x128xf32>,
    %c0_7 = arith.constant 0 : index
    %c0_8 = arith.constant 0 : index
    %13 = vector.load %arg5[%c0_7, %c0_8] : memref<1x128xf32, #tpu.memory_space<vmem>>, vector<1x128xf32>
    %cst_9 = arith.constant dense<0.000000e+00> : vector<128xf32>
    %14 = vector.multi_reduction <add>, %6, %cst_9 [0] : vector<64x128xf32> to vector<128xf32>
    %15 = vector.shape_cast %14 : vector<128xf32> to vector<1x128xf32>
    %16 = arith.addf %13, %15 : vector<1x128xf32>
    %c0_10 = arith.constant 0 : index
    %c0_11 = arith.constant 0 : index
    %17 = vector.load %arg5[%c0_10, %c0_11] : memref<1x128xf32, #tpu.memory_space<vmem>>, vector<1x128xf32>
    tpu.vector_store %arg5[%c0_10, %c0_11], %16 {strides = array<i32>} : memref<1x128xf32, #tpu.memory_space<vmem>>, vector<1x128xf32>,
    %c0_12 = arith.constant 0 : index
    %c0_13 = arith.constant 0 : index
    %18 = vector.load %arg6[%c0_12, %c0_13] : memref<1x128xf32, #tpu.memory_space<vmem>>, vector<1x128xf32>
    %19 = arith.mulf %6, %6 : vector<64x128xf32>
    %cst_14 = arith.constant dense<0.000000e+00> : vector<128xf32>
    %20 = vector.multi_reduction <add>, %19, %cst_14 [0] : vector<64x128xf32> to vector<128xf32>
    %21 = vector.shape_cast %20 : vector<128xf32> to vector<1x128xf32>
    %22 = arith.addf %18, %21 : vector<1x128xf32>
    %c0_15 = arith.constant 0 : index
    %c0_16 = arith.constant 0 : index
    %23 = vector.load %arg6[%c0_15, %c0_16] : memref<1x128xf32, #tpu.memory_space<vmem>>, vector<1x128xf32>
    tpu.vector_store %arg6[%c0_15, %c0_16], %22 {strides = array<i32>} : memref<1x128xf32, #tpu.memory_space<vmem>>, vector<1x128xf32>,
    %c0_i32_17 = arith.constant 0 : i32
    %24 = arith.cmpi eq, %arg1, %c0_i32_17 : i32
    %25 = arith.extui %24 : i1 to i32
    %c0_i32_18 = arith.constant 0 : i32
    %26 = arith.cmpi ne, %25, %c0_i32_18 : i32
    scf.if %26 {
      %c0_19 = arith.constant 0 : index
      %c0_20 = arith.constant 0 : index
      %27 = vector.load %arg5[%c0_19, %c0_20] : memref<1x128xf32, #tpu.memory_space<vmem>>, vector<1x128xf32>
      %cst_21 = arith.constant 1.562500e-02 : f32
      %28 = vector.broadcast %cst_21 : f32 to vector<1x128xf32>
      %29 = arith.mulf %27, %28 : vector<1x128xf32>
      %c0_22 = arith.constant 0 : index
      %c0_23 = arith.constant 0 : index
      %30 = vector.load %arg6[%c0_22, %c0_23] : memref<1x128xf32, #tpu.memory_space<vmem>>, vector<1x128xf32>
      %cst_24 = arith.constant 1.562500e-02 : f32
      %31 = vector.broadcast %cst_24 : f32 to vector<1x128xf32>
      %32 = arith.mulf %30, %31 : vector<1x128xf32>
      %33 = arith.mulf %29, %29 : vector<1x128xf32>
      %34 = arith.subf %32, %33 : vector<1x128xf32>
      %cst_25 = arith.constant 0.000000e+00 : f32
      %35 = vector.broadcast %cst_25 : f32 to vector<1x128xf32>
      %36 = arith.maximumf %34, %35 : vector<1x128xf32>
      %cst_26 = arith.constant 9.99999974E-6 : f32
      %37 = vector.broadcast %cst_26 : f32 to vector<1x128xf32>
      %38 = arith.addf %36, %37 : vector<1x128xf32>
      %39 = math.rsqrt %38 : vector<1x128xf32>
      %c0_27 = arith.constant 0 : index
      %c0_28 = arith.constant 0 : index
      %c0_29 = arith.constant 0 : index
      %40 = vector.load %arg4[%c0_27, %c0_28, %c0_29] : memref<1x64x128xf32, #tpu.memory_space<vmem>>, vector<1x64x128xf32>
      %41 = vector.shape_cast %40 : vector<1x64x128xf32> to vector<64x128xf32>
      %42 = vector.broadcast %29 : vector<1x128xf32> to vector<64x128xf32>
      %43 = arith.subf %41, %42 : vector<64x128xf32>
      %44 = vector.broadcast %39 : vector<1x128xf32> to vector<64x128xf32>
      %45 = arith.mulf %43, %44 : vector<64x128xf32>
      %cst_30 = arith.constant 0.000000e+00 : f32
      %46 = vector.broadcast %cst_30 : f32 to vector<64x128xf32>
      %47 = arith.maximumf %45, %46 : vector<64x128xf32>
      %c0_31 = arith.constant 0 : index
      %c0_32 = arith.constant 0 : index
      %c0_33 = arith.constant 0 : index
      %48 = vector.load %arg4[%c0_31, %c0_32, %c0_33] : memref<1x64x128xf32, #tpu.memory_space<vmem>>, vector<1x64x128xf32>
      %49 = vector.shape_cast %48 : vector<1x64x128xf32> to vector<64x128xf32>
      %50 = vector.shape_cast %47 : vector<64x128xf32> to vector<1x64x128xf32>
      tpu.vector_store %arg4[%c0_31, %c0_32, %c0_33], %50 {strides = array<i32>} : memref<1x64x128xf32, #tpu.memory_space<vmem>>, vector<1x64x128xf32>,
    } else {
    }
    return
  }
  func.func @transform_0(%arg0: i32, %arg1: i32) -> (i32, i32, i32) {
    %c0_i32 = arith.constant 0 : i32
    %c0_i32_0 = arith.constant 0 : i32
    return %arg0, %arg1, %c0_i32 : i32, i32, i32
  }
  func.func @transform_1(%arg0: i32, %arg1: i32) -> (i32, i32) {
    %c0_i32 = arith.constant 0 : i32
    %c0_i32_0 = arith.constant 0 : i32
    %c0_i32_1 = arith.constant 0 : i32
    return %c0_i32, %c0_i32_0 : i32, i32
  }
  func.func @transform_2(%arg0: i32, %arg1: i32) -> (i32, i32, i32) {
    %c0_i32 = arith.constant 0 : i32
    %c0_i32_0 = arith.constant 0 : i32
    %c0_i32_1 = arith.constant 0 : i32
    return %arg0, %c0_i32, %c0_i32_0 : i32, i32, i32
  }
}

</mosaic_0001>

<llo_original>
// kernel: contracting_block.1
$region0: #{contracting_block.1}
  #allocation0 [shape = 'u32[]', space=smem, size = 0x4, offset = 0x4, fixed_abs, tag = 'smem constant byte address 0x4 - core index']
  #allocation1 [shape = 'u32[72,128]{1,0:T(1,128)}', space=vmem, size = 0x9000, scoped, tag = 'internal scratch']
  #allocation2 [shape = 'f32[1,128]{1,0:T(1,128)}', space=vmem, size = 0x200, scoped, tag = 'scratch operand']
  #allocation3 [shape = 'f32[1,128]{1,0:T(1,128)}', space=vmem, size = 0x200, scoped, tag = 'scratch operand']
  %s0 = inlined_call_operand.vmem [shape: bf16[2,64,128], index: 0, kind: input, shape index: {}]
  %s1 = inlined_call_operand.vmem [shape: bf16[128,128], index: 1, kind: input, shape index: {}]
  %s2 = inlined_call_operand.vmem [shape: f32[2,64,128], index: 2, kind: output, shape index: {}]
  %s3 = sld [smem:[#allocation0]]
  $region49: #{contracting_block.1} parent=0
    _
  %s5 = ssub.s32 1, %s3
  %s6 = scalar_select 0, %s5, %s3
  loop: start=0, step=1, limit=4
  $region2: #{contracting_block.1} parent=0 // loop_pre_header
    _
  $region3: #{contracting_block.1} parent=0 // loop_header
    %s8 = sphi 0, %s12
    %p9 = scmp.ge.s32.totalorder %s8, 4
    %s15 = sphi 0, %s27
    %s16 = sphi 0, %s23
    %s17 = sphi 0, %s15
    %s18 = sphi 0, %s16
    %s19 = sphi 0, %s17
    %s20 = sphi 0, %s18
    %s32 = sphi 0, %s34
    %s35 = sphi 0, %s32
    %s36 = sphi 0, %s35
    %s52 = sphi 0, %s36
    %s56 = sphi 0, %s56
    %s58 = sphi 0, %s56
    %s59 = sphi 0, %s58
    %s73 = sphi 0, %s59
    %s79 = sphi 0, %s81
    %s82 = sphi 0, %s79
    %s83 = sphi 0, %s82
    %s99 = sphi 0, %s83
  $region4: #{contracting_block.1} parent=0 // loop_header_branch
    %11 = sbr.rel (%p9) target = $region8
  $region5: #{contracting_block.1} parent=0 // loop_body
    %s13 = ssub.s32 %s8, 1
    %s14 = ssub.s32 %s8, 2
    %s21 = sadd.s32 1, %s16
    %p22 = scmp.ge.s32.totalorder %s21, 1
    %s23 = scalar_select %p22, 0, %s21
    %s24 = sadd.s32 1, %s15
    %s25 = scalar_select %p22, %s24, %s15
    %p26 = scmp.ge.s32.totalorder %s25, 2
    %s27 = scalar_select %p26, 0, %s25
    %s28 = ssub.s32 %s15, %s27
    %s29 = ssub.s32 %s16, %s23
    %s30 = sor.u32 %s28, %s29
    %p31 = scmp.eq.s32.totalorder %s30, 0
    %s33 = sadd.s32 %s32, 1
    %s34 = scalar_select %p31, %s32, %s33
    %p37 = pneg %p31
    %p38 = scmp.eq.s32.totalorder %s8, 1
    %p39 = por %p37, %p38
    %p40 = scmp.ne.s32.totalorder %s32, %s35
    %p41 = scmp.eq.s32.totalorder %s8, 0
    %p42 = por %p40, %p41
    %p43 = scmp.ne.s32.totalorder %s32, %s35
    %p44 = scmp.eq.s32.totalorder %s13, 1
    %p45 = por %p43, %p44
    %p46 = scmp.ne.s32.totalorder %s35, %s36
    %p47 = scmp.eq.s32.totalorder %s13, 0
    %p48 = por %p46, %p47
    %p49 = scmp.ne.s32.totalorder %s35, %s36
    %p50 = scmp.eq.s32.totalorder %s14, 1
    %p51 = por %p49, %p50
    %p53 = scmp.ne.s32.totalorder %s36, %s52
    %p54 = scmp.eq.s32.totalorder %s14, 0
    %p55 = por %p53, %p54
    %s57 = sadd.s32 %s56, 1
    %p60 = scmp.eq.s32.totalorder %s8, 1
    %p61 = scmp.ne.s32.totalorder %s56, %s58
    %p62 = scmp.eq.s32.totalorder %s8, 0
    %p63 = por %p61, %p62
    %p64 = scmp.ne.s32.totalorder %s56, %s58
    %p65 = scmp.eq.s32.totalorder %s13, 1
    %p66 = por %p64, %p65
    %p67 = scmp.ne.s32.totalorder %s58, %s59
    %p68 = scmp.eq.s32.totalorder %s13, 0
    %p69 = por %p67, %p68
    %p70 = scmp.ne.s32.totalorder %s58, %s59
    %p71 = scmp.eq.s32.totalorder %s14, 1
    %p72 = por %p70, %p71
    %p74 = scmp.ne.s32.totalorder %s59, %s73
    %p75 = scmp.eq.s32.totalorder %s14, 0
    %p76 = por %p74, %p75
    %s77 = ssub.s32 %s15, %s27
    %p78 = scmp.eq.s32.totalorder %s77, 0
    %s80 = sadd.s32 %s79, 1
    %s81 = scalar_select %p78, %s79, %s80
    %p84 = pneg %p78
    %p85 = scmp.eq.s32.totalorder %s8, 1
    %p86 = por %p84, %p85
    %p87 = scmp.ne.s32.totalorder %s79, %s82
    %p88 = scmp.eq.s32.totalorder %s8, 0
    %p89 = por %p87, %p88
    %p90 = scmp.ne.s32.totalorder %s79, %s82
    %p91 = scmp.eq.s32.totalorder %s13, 1
    %p92 = por %p90, %p91
    %p93 = scmp.ne.s32.totalorder %s82, %s83
    %p94 = scmp.eq.s32.totalorder %s13, 0
    %p95 = por %p93, %p94
    %p96 = scmp.ne.s32.totalorder %s82, %s83
    %p97 = scmp.eq.s32.totalorder %s14, 1
    %p98 = por %p96, %p97
    %p100 = scmp.ne.s32.totalorder %s83, %s99
    %p101 = scmp.eq.s32.totalorder %s14, 0
    %p102 = por %p100, %p101
    %p103 = scmp.le.s32.totalorder 1, %s8
    %p104 = scmp.lt.s32.totalorder %s8, 3
    %p105 = pnand %p103, %p104
    %p106 = pneg %p105
    // Predicated region
    $region9: #{contracting_block.1} parent=5 // pred_check
      _
    $region10: #{contracting_block.1} parent=5 // pred_check_branch
      %108 = sbr.rel (%p105) target = $region12
    $region11: #{contracting_block.1} parent=5 // pred_region
      %s109 = ssub.s32 %s8, 1
      // Predicated region
      $region13: #{contracting_block.1} parent=11 // pred_check
        %p110 = pneg %p69
      $region14: #{contracting_block.1} parent=11 // pred_check_branch
        %112 = sbr.rel (%p110) target = $region16
      $region15: #{contracting_block.1} parent=11 // pred_region
        _
      $region16: #{contracting_block.1} parent=11 // pred_fallthru
        _
    $region12: #{contracting_block.1} parent=5 // pred_fallthru
      _
    %p113 = scmp.lt.s32.totalorder %s8, 2
    // Predicated region
    $region17: #{contracting_block.1} parent=5 // pred_check
      %p114 = pneg %p113
    $region18: #{contracting_block.1} parent=5 // pred_check_branch
      %116 = sbr.rel (%p114) target = $region20
    $region19: #{contracting_block.1} parent=5 // pred_region
      // Predicated region
      $region21: #{contracting_block.1} parent=19 // pred_check
        %p117 = pneg %p42
      $region22: #{contracting_block.1} parent=19 // pred_check_branch
        %119 = sbr.rel (%p117) target = $region24
      $region23: #{contracting_block.1} parent=19 // pred_region
        %s120 = smul.u32 8, %s16
        %p121 = scmp.lt.s32.totalorder %s15, 1
        %s122 = scalar_select %p121, %s15, 1
        %p123 = scmp.lt.s32.totalorder %s120, 7
        %s124 = scalar_select %p123, %s120, 7
        %s125 = smul.addr %s122, 8
        %s126 = sadd.s32 %s124, %s125
        %s127 = smul.addr %s126, 4
        %s128 = scalar_lea.vmem %s0, %s127
        %s129 = smul.u32 8, %s16
      $region24: #{contracting_block.1} parent=19 // pred_fallthru
        _
    $region20: #{contracting_block.1} parent=5 // pred_fallthru
      _
    %p130 = scmp.le.s32.totalorder 1, %s8
    %p131 = scmp.lt.s32.totalorder %s8, 3
    %p132 = pnand %p130, %p131
    %p133 = pneg %p132
    // Predicated region
    $region25: #{contracting_block.1} parent=5 // pred_check
      _
    $region26: #{contracting_block.1} parent=5 // pred_check_branch
      %135 = sbr.rel (%p132) target = $region28
    $region27: #{contracting_block.1} parent=5 // pred_region
      %s136 = ssub.s32 %s8, 1
      %s137 = smul.u32 8, %s18
      %p138 = scmp.lt.s32.totalorder %s17, 1
      %s139 = scalar_select %p138, %s17, 1
      %p140 = scmp.lt.s32.totalorder %s137, 7
      %s141 = scalar_select %p140, %s137, 7
      %s142 = smul.addr %s139, 8
      %s143 = sadd.s32 %s141, %s142
      %s144 = smul.addr %s143, 4
      %s145 = scalar_lea.vmem %s0, %s144
      %p146 = pneg %p48
      %p147 = pneg %p45
      %p148 = pneg %p69
      %p149 = pneg %p66
      %p150 = pneg %p95
      %p151 = pneg %p92
      %p152 = scmp.lt.s32.totalorder %s17, 1
      %s153 = scalar_select %p152, %s17, 1
      %s154 = smul.addr %s153, 8
      %s155 = smul.addr %s154, 8
      %s156 = scalar_lea.vmem %s2, %s155
      %s157 = smul.u32 8, %s18
      %p158 = scmp.lt.s32.totalorder %s17, 1
      %s159 = scalar_select %p158, %s17, 1
      %p160 = scmp.lt.s32.totalorder %s157, 7
      %s161 = scalar_select %p160, %s157, 7
      %s162 = smul.addr %s159, 8
      %s163 = sadd.s32 %s161, %s162
      %s164 = smul.addr %s163, 4
      %s165 = scalar_lea.vmem %s0, %s164
      %s166 = smul.u32 8, %s18
      %p167 = scmp.lt.s32.totalorder %s17, 1
      %s168 = scalar_select %p167, %s17, 1
      %s169 = smul.addr %s168, 8
      %s170 = smul.addr %s169, 8
      %s171 = scalar_lea.vmem %s2, %s170
      %p172 = scmp.eq.s32.totalorder %s18, 0
      // Predicated region
      $region29: #{contracting_block.1} parent=27 // pred_check
        %p173 = pneg %p172
      $region30: #{contracting_block.1} parent=27 // pred_check_branch
        %175 = sbr.rel (%p173) target = $region32
      $region31: #{contracting_block.1} parent=27 // pred_region
        %176 = vst [vmem:[#allocation2] sm:$0x1] 0.0
        %177 = vst [vmem:[#allocation3] sm:$0x1] 0.0
      $region32: #{contracting_block.1} parent=27 // pred_fallthru
        _
      %v178 = vld [vmem:[%s165] sm:$0xf]
      %v179 = vld [vmem:[%s165 + $0x4] sm:$0xf]
      %v180 = vld [vmem:[%s165 + $0x8] sm:$0xf]
      %v181 = vld [vmem:[%s165 + $0xc] sm:$0xf]
      %v182 = vld [vmem:[%s165 + $0x10] sm:$0xf]
      %v183 = vld [vmem:[%s165 + $0x14] sm:$0xf]
      %v184 = vld [vmem:[%s165 + $0x18] sm:$0xf]
      %v185 = vld [vmem:[%s165 + $0x1c] sm:$0xf]
      %v186 = vld [vmem:[%s1] sm:$0xf]
      %v187 = vld [vmem:[%s1 + $0x4] sm:$0xf]
      %v188 = vld [vmem:[%s1 + $0x8] sm:$0xf]
      %v189 = vld [vmem:[%s1 + $0xc] sm:$0xf]
      %v190 = vld [vmem:[%s1 + $0x10] sm:$0xf]
      %v191 = vld [vmem:[%s1 + $0x14] sm:$0xf]
      %v192 = vld [vmem:[%s1 + $0x18] sm:$0xf]
      %v193 = vld [vmem:[%s1 + $0x1c] sm:$0xf]
      %v194 = vld [vmem:[%s1 + $0x20] sm:$0xf]
      %v195 = vld [vmem:[%s1 + $0x24] sm:$0xf]
      %v196 = vld [vmem:[%s1 + $0x28] sm:$0xf]
      %v197 = vld [vmem:[%s1 + $0x2c] sm:$0xf]
      %v198 = vld [vmem:[%s1 + $0x30] sm:$0xf]
      %v199 = vld [vmem:[%s1 + $0x34] sm:$0xf]
      %v200 = vld [vmem:[%s1 + $0x38] sm:$0xf]
      %v201 = vld [vmem:[%s1 + $0x3c] sm:$0xf]
      %v210 = vunpack.c.l.b16 %v178
      %v211 = vunpack.c.l.b16 %v179
      %v212 = vunpack.c.l.b16 %v180
      %v213 = vunpack.c.l.b16 %v181
      %v214 = vunpack.c.l.b16 %v182
      %v215 = vunpack.c.l.b16 %v183
      %v216 = vunpack.c.l.b16 %v184
      %v217 = vunpack.c.l.b16 %v185
      %v218 = vpack.c.b16 %v211, %v210
      %v219 = vpack.c.b16 %v213, %v212
      %v220 = vpack.c.b16 %v215, %v214
      %v221 = vpack.c.b16 %v217, %v216
      %v242 = vunpack.c.l.b16 %v186
      %v243 = vunpack.c.l.b16 %v187
      %v244 = vunpack.c.l.b16 %v188
      %v245 = vunpack.c.l.b16 %v189
      %v246 = vunpack.c.l.b16 %v190
      %v247 = vunpack.c.l.b16 %v191
      %v248 = vunpack.c.l.b16 %v192
      %v249 = vunpack.c.l.b16 %v193
      %v250 = vunpack.c.l.b16 %v194
      %v251 = vunpack.c.l.b16 %v195
      %v252 = vunpack.c.l.b16 %v196
      %v253 = vunpack.c.l.b16 %v197
      %v254 = vunpack.c.l.b16 %v198
      %v255 = vunpack.c.l.b16 %v199
      %v256 = vunpack.c.l.b16 %v200
      %v257 = vunpack.c.l.b16 %v201
      %v258 = vpack.c.b16 %v243, %v242
      %v259 = vpack.c.b16 %v245, %v244
      %v260 = vpack.c.b16 %v247, %v246
      %v261 = vpack.c.b16 %v249, %v248
      %v262 = vpack.c.b16 %v251, %v250
      %v263 = vpack.c.b16 %v253, %v252
      %v264 = vpack.c.b16 %v255, %v254
      %v265 = vpack.c.b16 %v257, %v256
      %274 = vmatpush.bf16.msra.mxu0 %v265
      %275 = vmatpush.bf16.msra.mxu0 %v264
      %276 = vmatpush.bf16.msra.mxu0 %v263
      %277 = vmatpush.bf16.msra.mxu0 %v262
      %278 = vmatpush.bf16.msra.mxu0 %v261
      %279 = vmatpush.bf16.msra.mxu0 %v260
      %280 = vmatpush.bf16.msra.mxu0 %v259
      %281 = vmatpush.bf16.msra.mxu0 %v258
      %282 = vmatmul.bf16.gmra.mxu0 %v218
      %v283 = vpop.f32.mrf.mxu0
      %v284 = vadd.f32 0.0, %v283
      %v285 = vpop.f32.mrf.mxu0
      %v286 = vadd.f32 0.0, %v285
      %287 = vmatmul.bf16.gmra.mxu0 %v219
      %v288 = vpop.f32.mrf.mxu0
      %v289 = vadd.f32 0.0, %v288
      %v290 = vpop.f32.mrf.mxu0
      %v291 = vadd.f32 0.0, %v290
      %292 = vmatmul.bf16.gmra.mxu0 %v220
      %v293 = vpop.f32.mrf.mxu0
      %v294 = vadd.f32 0.0, %v293
      %v295 = vpop.f32.mrf.mxu0
      %v296 = vadd.f32 0.0, %v295
      %297 = vmatmul.bf16.gmra.mxu0 %v221
      %v298 = vpop.f32.mrf.mxu0
      %v299 = vadd.f32 0.0, %v298
      %v300 = vpop.f32.mrf.mxu0
      %v301 = vadd.f32 0.0, %v300
      %302 = vdwg.mxu0
      %s303 = smul.u32 %s18, 64
      %s304 = scalar_lea.vmem %s171, %s303
      %305 = vst [vmem:[%s304] sm:$0xff] %v284
      %306 = vst [vmem:[%s304 + $0x8] sm:$0xff] %v286
      %307 = vst [vmem:[%s304 + $0x10] sm:$0xff] %v289
      %308 = vst [vmem:[%s304 + $0x18] sm:$0xff] %v291
      %309 = vst [vmem:[%s304 + $0x20] sm:$0xff] %v294
      %310 = vst [vmem:[%s304 + $0x28] sm:$0xff] %v296
      %311 = vst [vmem:[%s304 + $0x30] sm:$0xff] %v299
      %312 = vst [vmem:[%s304 + $0x38] sm:$0xff] %v301
      %v313 = vld [vmem:[#allocation2] sm:$0x1]
      %v314 = vadd.f32 %v284, %v286
      %v315 = vadd.f32 %v314, %v289
      %v316 = vadd.f32 %v315, %v291
      %v317 = vadd.f32 %v316, %v294
      %v318 = vadd.f32 %v317, %v296
      %v319 = vadd.f32 %v318, %v299
      %v320 = vadd.f32 %v319, %v301
      %v321 = vrot.slane %v320, 4
      %v322 = vadd.f32 %v320, %v321
      %v323 = vrot.slane %v322, 2
      %v324 = vadd.f32 %v322, %v323
      %v325 = vrot.slane %v324, 1
      %v326 = vadd.f32 %v324, %v325
      %v327 = vadd.f32 %v313, %v326
      %328 = vst [vmem:[#allocation2] sm:$0x1] %v327
      %v329 = vld [vmem:[#allocation3] sm:$0x1]
      %v330 = vmul.f32 %v284, %v284
      %v331 = vmul.f32 %v286, %v286
      %v332 = vmul.f32 %v289, %v289
      %v333 = vmul.f32 %v291, %v291
      %v334 = vmul.f32 %v294, %v294
      %v335 = vmul.f32 %v296, %v296
      %v336 = vmul.f32 %v299, %v299
      %v337 = vmul.f32 %v301, %v301
      %v338 = vadd.f32 %v330, %v331
      %v339 = vadd.f32 %v338, %v332
      %v340 = vadd.f32 %v339, %v333
      %v341 = vadd.f32 %v340, %v334
      %v342 = vadd.f32 %v341, %v335
      %v343 = vadd.f32 %v342, %v336
      %v344 = vadd.f32 %v343, %v337
      %v345 = vrot.slane %v344, 4
      %v346 = vadd.f32 %v344, %v345
      %v347 = vrot.slane %v346, 2
      %v348 = vadd.f32 %v346, %v347
      %v349 = vrot.slane %v348, 1
      %v350 = vadd.f32 %v348, %v349
      %v351 = vadd.f32 %v329, %v350
      %352 = vst [vmem:[#allocation3] sm:$0x1] %v351
      // Predicated region
      $region33: #{contracting_block.1} parent=27 // pred_check
        %p353 = pneg %p172
      $region34: #{contracting_block.1} parent=27 // pred_check_branch
        %355 = sbr.rel (%p353) target = $region36
      $region35: #{contracting_block.1} parent=27 // pred_region
        %v356 = vld [vmem:[#allocation2] sm:$0x1]
        %v357 = vmul.f32 %v356, 0.015625
        %v358 = vld [vmem:[#allocation3] sm:$0x1]
        %v359 = vmul.f32 %v358, 0.015625
        %v360 = vmul.f32 %v357, %v357
        %v361 = vsub.f32 %v359, %v360
        %v362 = vmax.f32 %v361, 0.0
        %v363 = vadd.f32 %v362, 1e-05
        %v364 = vrsqrt.pop %v363
        %v365 = vmul.f32 %v364, %v363
        %v366 = vmul.f32 %v365, %v364
        %v367 = vmul.f32 0.5, %v366
        %v368 = vsub.f32 1.5, %v367
        %v369 = vmul.f32 %v364, %v368
        %vm370 = vweird.f32 %v363
        %vm371 = vweird.f32 %v364
        %vm372 = vmor %vm370, %vm371
        %v373 = vsel %vm372, %v364, %v369
        %v374 = vld [vmem:[%s171] sm:$0xff]
        %v375 = vld [vmem:[%s171 + $0x8] sm:$0xff]
        %v376 = vld [vmem:[%s171 + $0x10] sm:$0xff]
        %v377 = vld [vmem:[%s171 + $0x18] sm:$0xff]
        %v378 = vld [vmem:[%s171 + $0x20] sm:$0xff]
        %v379 = vld [vmem:[%s171 + $0x28] sm:$0xff]
        %v380 = vld [vmem:[%s171 + $0x30] sm:$0xff]
        %v381 = vld [vmem:[%s171 + $0x38] sm:$0xff]
        %v383 = vperm.slane %v357, 0
        %v385 = vsub.f32 %v374, %v383
        %v386 = vsub.f32 %v375, %v383
        %v387 = vsub.f32 %v376, %v383
        %v388 = vsub.f32 %v377, %v383
        %v389 = vsub.f32 %v378, %v383
        %v390 = vsub.f32 %v379, %v383
        %v391 = vsub.f32 %v380, %v383
        %v392 = vsub.f32 %v381, %v383
        %v394 = vperm.slane %v373, 0
        %v396 = vmul.f32 %v385, %v394
        %v397 = vmul.f32 %v386, %v394
        %v398 = vmul.f32 %v387, %v394
        %v399 = vmul.f32 %v388, %v394
        %v400 = vmul.f32 %v389, %v394
        %v401 = vmul.f32 %v390, %v394
        %v402 = vmul.f32 %v391, %v394
        %v403 = vmul.f32 %v392, %v394
        %v404 = vmax.f32 %v396, 0.0
        %v405 = vmax.f32 %v397, 0.0
        %v406 = vmax.f32 %v398, 0.0
        %v407 = vmax.f32 %v399, 0.0
        %v408 = vmax.f32 %v400, 0.0
        %v409 = vmax.f32 %v401, 0.0
        %v410 = vmax.f32 %v402, 0.0
        %v411 = vmax.f32 %v403, 0.0
        %412 = vst [vmem:[%s171] sm:$0xff] %v404
        %413 = vst [vmem:[%s171 + $0x8] sm:$0xff] %v405
        %414 = vst [vmem:[%s171 + $0x10] sm:$0xff] %v406
        %415 = vst [vmem:[%s171 + $0x18] sm:$0xff] %v407
        %416 = vst [vmem:[%s171 + $0x20] sm:$0xff] %v408
        %417 = vst [vmem:[%s171 + $0x28] sm:$0xff] %v409
        %418 = vst [vmem:[%s171 + $0x30] sm:$0xff] %v410
        %419 = vst [vmem:[%s171 + $0x38] sm:$0xff] %v411
      $region36: #{contracting_block.1} parent=27 // pred_fallthru
        _
      %p420 = scmp.lt.s32.totalorder %s17, 1
      %s421 = scalar_select %p420, %s17, 1
      %s422 = smul.addr %s421, 8
      %s423 = smul.addr %s422, 8
      %s424 = scalar_lea.vmem %s2, %s423
      // Predicated region
      $region37: #{contracting_block.1} parent=27 // pred_check
        %p425 = pneg %p92
      $region38: #{contracting_block.1} parent=27 // pred_check_branch
        %427 = sbr.rel (%p425) target = $region40
      $region39: #{contracting_block.1} parent=27 // pred_region
        _
      $region40: #{contracting_block.1} parent=27 // pred_fallthru
        _
    $region28: #{contracting_block.1} parent=5 // pred_fallthru
      _
    %p428 = scmp.le.s32.totalorder 2, %s8
    // Predicated region
    $region41: #{contracting_block.1} parent=5 // pred_check
      %p429 = pneg %p428
    $region42: #{contracting_block.1} parent=5 // pred_check_branch
      %431 = sbr.rel (%p429) target = $region44
    $region43: #{contracting_block.1} parent=5 // pred_region
      %s432 = ssub.s32 %s8, 2
      // Predicated region
      $region45: #{contracting_block.1} parent=43 // pred_check
        %p433 = pneg %p98
      $region46: #{contracting_block.1} parent=43 // pred_check_branch
        %435 = sbr.rel (%p433) target = $region48
      $region47: #{contracting_block.1} parent=43 // pred_region
        %p436 = scmp.lt.s32.totalorder %s19, 1
        %s437 = scalar_select %p436, %s19, 1
        %s438 = smul.addr %s437, 8
        %s439 = smul.addr %s438, 8
        %s440 = scalar_lea.vmem %s2, %s439
      $region48: #{contracting_block.1} parent=43 // pred_fallthru
        _
    $region44: #{contracting_block.1} parent=5 // pred_fallthru
      _
  $region6: #{contracting_block.1} parent=0 // loop_footer
    %s12 = sadd.s32 1, %s8
  $region7: #{contracting_block.1} parent=0 // loop_footer_branch
    %7 = sbr.rel target = $region3
  $region8: #{contracting_block.1} parent=0 // loop_exit
    _

</llo_original>
